<compile_context>
chip_gen: v5e
topology: v5e:2x2
jax: 0.10.0
libtpu: 0.0.40
codegen_flags: <defaults>
</compile_context>

<pallas_src>
import jax
import jax.numpy as jnp
from jax.experimental import pallas as pl
from jax.experimental.pallas import tpu as pltpu


def plane_depth_kernel(x_ref, w_enc_ref, b_enc_ref, w_feat_ref, gbias_ref, o_ref):
    # x_ref:     (B, Cin, TP)   NCHW input, pixels flattened on lanes
    # w_enc_ref: (C, Cin)       encoder 1x1-conv weight (transposed)
    # b_enc_ref: (C, 1)         encoder bias
    # w_feat_ref:(C, 1)         decoder 1x1-conv weight
    # gbias_ref: (1, TP)        precomputed grid term: gx*wg0 + gy*wg1 + b_dec
    # o_ref:     (B, 1, TP)     normalized disparity
    B, Cin, _ = x_ref.shape

    w_enc = w_enc_ref[...]          # (C, Cin)
    b_enc = b_enc_ref[...]          # (C, 1)
    w_feat = w_feat_ref[...]        # (C, 1)
    gbias = gbias_ref[...]          # (1, TP)

    for b in range(B):              # B is small; static unroll, 2D tiles inside
        x = x_ref[b]                # (Cin, TP)

        # "encoder": 1x1 conv over channels as VPU FMAs (K=Cin is tiny; the
        # MXU would be >97% idle), then ReLU.
        feat = b_enc + w_enc[:, 0:1] * x[0:1, :]          # (C, TP)
        for cin in range(1, Cin):
            feat = feat + w_enc[:, cin:cin + 1] * x[cin:cin + 1, :]
        feat = jnp.maximum(feat, 0.0)                     # (C, TP)

        # "decoder": channel contraction as VPU mul + cross-sublane reduce,
        # plus the (folded) plane-grid bias, sigmoid 'disp' head.
        dec = jnp.sum(feat * w_feat, axis=0, keepdims=True)   # (1, TP)
        disp = jax.nn.sigmoid(dec + gbias)                    # (1, TP)

        # wrapper normalization from the reference forward
        o_ref[b] = (disp - 0.7424) * (1.0 / 741.6576)


def plane_depth_forward(input_color_nchw, params, *, tile_pixels=2048):
    """input_color_nchw: (B, Cin, H, W) float32 -> pred_disp (B, 1, H, W)."""
    B, Cin, H, W = input_color_nchw.shape
    C = params["w_enc"].shape[1]
    P = H * W

    # Pixel tiling: single step for small images, lane-dense tiles otherwise
    # (bounds VMEM on v7x and gives megacore parallelism even when B == 1).
    if P <= tile_pixels:
        TP = P
    else:
        TP = tile_pixels
        while P % TP != 0:          # keep tiles a multiple of 128 dividing P
            TP -= 128
    num_tiles = P // TP

    # Plane grid exactly like torch.meshgrid(..., indexing='xy'), folded with
    # the (input-independent) decoder grid weights into a single lane bias.
    xs = jnp.linspace(-1.0, 1.0, W, dtype=jnp.float32)
    ys = jnp.linspace(-1.0, 1.0, H, dtype=jnp.float32)
    gx, gy = jnp.meshgrid(xs, ys, indexing="xy")          # each (H, W)
    gbias = (gx * params["w_grid"][0, 0]
             + gy * params["w_grid"][1, 0]
             + params["b_dec"][0, 0]).reshape(1, P)       # (1, P)

    # NCHW consumed directly; flattening H,W is a free (no-transpose) reshape.
    x_flat = input_color_nchw.reshape(B, Cin, P)
    w_enc_t = params["w_enc"].T                            # (C, Cin)
    b_enc_col = params["b_enc"].reshape(C, 1)              # (C, 1)
    w_feat = params["w_feat"]                              # (C, 1)

    out = pl.pallas_call(
        plane_depth_kernel,
        out_shape=jax.ShapeDtypeStruct((B, 1, P), jnp.float32),
        grid_spec=pltpu.PrefetchScalarGridSpec(
            num_scalar_prefetch=0,
            grid=(num_tiles,),
            in_specs=[
                pl.BlockSpec((B, Cin, TP), lambda t: (0, 0, t)),
                pl.BlockSpec((C, Cin), lambda t: (0, 0)),
                pl.BlockSpec((C, 1), lambda t: (0, 0)),
                pl.BlockSpec((C, 1), lambda t: (0, 0)),
                pl.BlockSpec((1, TP), lambda t: (0, t)),
            ],
            out_specs=pl.BlockSpec((B, 1, TP), lambda t: (0, 0, t)),
        ),
        compiler_params=pltpu.CompilerParams(
            dimension_semantics=("parallel",),
            vmem_limit_bytes=32 * 1024 * 1024,
        ),
    )(x_flat, w_enc_t, b_enc_col, w_feat, gbias)

    # (B, 1, P) -> (B, 1, H, W): free reshape, already NCHW like the module.
    return out.reshape(B, 1, H, W)


def init_params(key, cin, c):
    k1, k2, k3, k4 = jax.random.split(key, 4)
    return {
        "w_enc": jax.random.normal(k1, (cin, c), jnp.float32) * 0.1,
        "b_enc": jnp.zeros((1, c), jnp.float32),
        "w_feat": jax.random.normal(k2, (c, 1), jnp.float32) * 0.1,
        "w_grid": jax.random.normal(k3, (2, 1), jnp.float32) * 0.1,
        "b_dec": jax.random.normal(k4, (1, 1), jnp.float32) * 0.1,
    }


if __name__ == "__main__":
    # Config.input_H_PD = Config.input_W_PD = 16 for this synthetic test.
    B, Cin, H, W, C = 2, 3, 16, 16, 32

    key = jax.random.PRNGKey(0)
    k_x, k_p = jax.random.split(key)
    input_color = jax.random.uniform(k_x, (B, Cin, H, W), jnp.float32)  # NCHW
    params = init_params(k_p, Cin, C)

    pred_disp = plane_depth_forward(input_color, params)
    jax.block_until_ready(pred_disp)

    assert pred_disp.shape == (B, 1, H, W), pred_disp.shape
    assert pred_disp.dtype == jnp.float32

    # TODO(synk): the real encoder/decoder (e.g. ResNet + PlaneDepth decoder)
    # are external modules; a synthetic 1x1-conv pair stands in for them here.
    print("KERNEL_OK")
</pallas_src>

<mosaic_0001>
module attributes {stable_mosaic.version = 11 : i64} {
  func.func @plane_depth_kernel(%arg0: i32, %arg1: memref<2x3x256xf32, #tpu.memory_space<vmem>>, %arg2: memref<32x3xf32, #tpu.memory_space<vmem>>, %arg3: memref<32x1xf32, #tpu.memory_space<vmem>>, %arg4: memref<32x1xf32, #tpu.memory_space<vmem>>, %arg5: memref<1x256xf32, #tpu.memory_space<vmem>>, %arg6: memref<2x1x256xf32, #tpu.memory_space<vmem>>) attributes {dimension_semantics = [#tpu.dimension_semantics<parallel>], iteration_bounds = array<i64: 1>, scalar_prefetch = 0 : i64, scratch_operands = 0 : i64, tpu.core_type = #tpu.core_type<tc>, window_params = [{transform_indices = @transform_0, window_bounds = array<i64: 2, 3, 256>}, {pipeline_mode = #tpu.pipeline_mode<synchronous>, transform_indices = @transform_1, window_bounds = array<i64: 32, 3>}, {pipeline_mode = #tpu.pipeline_mode<synchronous>, transform_indices = @transform_2, window_bounds = array<i64: 32, 1>}, {pipeline_mode = #tpu.pipeline_mode<synchronous>, transform_indices = @transform_3, window_bounds = array<i64: 32, 1>}, {transform_indices = @transform_4, window_bounds = array<i64: 1, 256>}, {transform_indices = @transform_5, window_bounds = array<i64: 2, 1, 256>}]} {
    %c0 = arith.constant 0 : index
    %c0_0 = arith.constant 0 : index
    %0 = vector.load %arg2[%c0, %c0_0] : memref<32x3xf32, #tpu.memory_space<vmem>>, vector<32x3xf32>
    %c0_1 = arith.constant 0 : index
    %c0_2 = arith.constant 0 : index
    %1 = vector.load %arg3[%c0_1, %c0_2] : memref<32x1xf32, #tpu.memory_space<vmem>>, vector<32x1xf32>
    %c0_3 = arith.constant 0 : index
    %c0_4 = arith.constant 0 : index
    %2 = vector.load %arg4[%c0_3, %c0_4] : memref<32x1xf32, #tpu.memory_space<vmem>>, vector<32x1xf32>
    %c0_5 = arith.constant 0 : index
    %c0_6 = arith.constant 0 : index
    %3 = vector.load %arg5[%c0_5, %c0_6] : memref<1x256xf32, #tpu.memory_space<vmem>>, vector<1x256xf32>
    %c0_7 = arith.constant 0 : index
    %c0_8 = arith.constant 0 : index
    %c0_9 = arith.constant 0 : index
    %4 = vector.load %arg1[%c0_7, %c0_8, %c0_9] : memref<2x3x256xf32, #tpu.memory_space<vmem>>, vector<1x3x256xf32>
    %5 = vector.shape_cast %4 : vector<1x3x256xf32> to vector<3x256xf32>
    %6 = vector.extract_strided_slice %0 {offsets = [0, 0], sizes = [32, 1], strides = [1, 1]} : vector<32x3xf32> to vector<32x1xf32>
    %7 = vector.extract_strided_slice %5 {offsets = [0, 0], sizes = [1, 256], strides = [1, 1]} : vector<3x256xf32> to vector<1x256xf32>
    %8 = vector.broadcast %6 : vector<32x1xf32> to vector<32x256xf32>
    %9 = vector.broadcast %7 : vector<1x256xf32> to vector<32x256xf32>
    %10 = arith.mulf %8, %9 : vector<32x256xf32>
    %11 = vector.broadcast %1 : vector<32x1xf32> to vector<32x256xf32>
    %12 = arith.addf %11, %10 : vector<32x256xf32>
    %13 = vector.extract_strided_slice %0 {offsets = [0, 1], sizes = [32, 1], strides = [1, 1]} : vector<32x3xf32> to vector<32x1xf32>
    %14 = vector.extract_strided_slice %5 {offsets = [1, 0], sizes = [1, 256], strides = [1, 1]} : vector<3x256xf32> to vector<1x256xf32>
    %15 = vector.broadcast %13 : vector<32x1xf32> to vector<32x256xf32>
    %16 = vector.broadcast %14 : vector<1x256xf32> to vector<32x256xf32>
    %17 = arith.mulf %15, %16 : vector<32x256xf32>
    %18 = arith.addf %12, %17 : vector<32x256xf32>
    %19 = vector.extract_strided_slice %0 {offsets = [0, 2], sizes = [32, 1], strides = [1, 1]} : vector<32x3xf32> to vector<32x1xf32>
    %20 = vector.extract_strided_slice %5 {offsets = [2, 0], sizes = [1, 256], strides = [1, 1]} : vector<3x256xf32> to vector<1x256xf32>
    %21 = vector.broadcast %19 : vector<32x1xf32> to vector<32x256xf32>
    %22 = vector.broadcast %20 : vector<1x256xf32> to vector<32x256xf32>
    %23 = arith.mulf %21, %22 : vector<32x256xf32>
    %24 = arith.addf %18, %23 : vector<32x256xf32>
    %cst = arith.constant 0.000000e+00 : f32
    %25 = vector.broadcast %cst : f32 to vector<32x256xf32>
    %26 = arith.maximumf %24, %25 : vector<32x256xf32>
    %27 = vector.broadcast %2 : vector<32x1xf32> to vector<32x256xf32>
    %28 = arith.mulf %26, %27 : vector<32x256xf32>
    %cst_10 = arith.constant dense<0.000000e+00> : vector<256xf32>
    %29 = vector.multi_reduction <add>, %28, %cst_10 [0] : vector<32x256xf32> to vector<256xf32>
    %30 = vector.shape_cast %29 : vector<256xf32> to vector<1x256xf32>
    %31 = arith.addf %30, %3 : vector<1x256xf32>
    %32 = arith.negf %31 : vector<1x256xf32>
    %33 = math.exp %32 : vector<1x256xf32>
    %cst_11 = arith.constant 1.000000e+00 : f32
    %34 = vector.broadcast %cst_11 : f32 to vector<1x256xf32>
    %35 = arith.addf %34, %33 : vector<1x256xf32>
    %36 = arith.divf %34, %35 : vector<1x256xf32>
    %cst_12 = arith.constant 0.74239999 : f32
    %37 = vector.broadcast %cst_12 : f32 to vector<1x256xf32>
    %38 = arith.subf %36, %37 : vector<1x256xf32>
    %cst_13 = arith.constant 0.0013483311 : f32
    %39 = vector.broadcast %cst_13 : f32 to vector<1x256xf32>
    %40 = arith.mulf %38, %39 : vector<1x256xf32>
    %c0_14 = arith.constant 0 : index
    %c0_15 = arith.constant 0 : index
    %c0_16 = arith.constant 0 : index
    %41 = vector.load %arg6[%c0_14, %c0_15, %c0_16] : memref<2x1x256xf32, #tpu.memory_space<vmem>>, vector<1x1x256xf32>
    %42 = vector.shape_cast %41 : vector<1x1x256xf32> to vector<1x256xf32>
    %43 = vector.shape_cast %40 : vector<1x256xf32> to vector<1x1x256xf32>
    tpu.vector_store %arg6[%c0_14, %c0_15, %c0_16], %43 {strides = array<i32>} : memref<2x1x256xf32, #tpu.memory_space<vmem>>, vector<1x1x256xf32>,
    %c1 = arith.constant 1 : index
    %c0_17 = arith.constant 0 : index
    %c0_18 = arith.constant 0 : index
    %44 = vector.load %arg1[%c1, %c0_17, %c0_18] : memref<2x3x256xf32, #tpu.memory_space<vmem>>, vector<1x3x256xf32>
    %45 = vector.shape_cast %44 : vector<1x3x256xf32> to vector<3x256xf32>
    %46 = vector.extract_strided_slice %0 {offsets = [0, 0], sizes = [32, 1], strides = [1, 1]} : vector<32x3xf32> to vector<32x1xf32>
    %47 = vector.extract_strided_slice %45 {offsets = [0, 0], sizes = [1, 256], strides = [1, 1]} : vector<3x256xf32> to vector<1x256xf32>
    %48 = vector.broadcast %46 : vector<32x1xf32> to vector<32x256xf32>
    %49 = vector.broadcast %47 : vector<1x256xf32> to vector<32x256xf32>
    %50 = arith.mulf %48, %49 : vector<32x256xf32>
    %51 = vector.broadcast %1 : vector<32x1xf32> to vector<32x256xf32>
    %52 = arith.addf %51, %50 : vector<32x256xf32>
    %53 = vector.extract_strided_slice %0 {offsets = [0, 1], sizes = [32, 1], strides = [1, 1]} : vector<32x3xf32> to vector<32x1xf32>
    %54 = vector.extract_strided_slice %45 {offsets = [1, 0], sizes = [1, 256], strides = [1, 1]} : vector<3x256xf32> to vector<1x256xf32>
    %55 = vector.broadcast %53 : vector<32x1xf32> to vector<32x256xf32>
    %56 = vector.broadcast %54 : vector<1x256xf32> to vector<32x256xf32>
    %57 = arith.mulf %55, %56 : vector<32x256xf32>
    %58 = arith.addf %52, %57 : vector<32x256xf32>
    %59 = vector.extract_strided_slice %0 {offsets = [0, 2], sizes = [32, 1], strides = [1, 1]} : vector<32x3xf32> to vector<32x1xf32>
    %60 = vector.extract_strided_slice %45 {offsets = [2, 0], sizes = [1, 256], strides = [1, 1]} : vector<3x256xf32> to vector<1x256xf32>
    %61 = vector.broadcast %59 : vector<32x1xf32> to vector<32x256xf32>
    %62 = vector.broadcast %60 : vector<1x256xf32> to vector<32x256xf32>
    %63 = arith.mulf %61, %62 : vector<32x256xf32>
    %64 = arith.addf %58, %63 : vector<32x256xf32>
    %cst_19 = arith.constant 0.000000e+00 : f32
    %65 = vector.broadcast %cst_19 : f32 to vector<32x256xf32>
    %66 = arith.maximumf %64, %65 : vector<32x256xf32>
    %67 = vector.broadcast %2 : vector<32x1xf32> to vector<32x256xf32>
    %68 = arith.mulf %66, %67 : vector<32x256xf32>
    %cst_20 = arith.constant dense<0.000000e+00> : vector<256xf32>
    %69 = vector.multi_reduction <add>, %68, %cst_20 [0] : vector<32x256xf32> to vector<256xf32>
    %70 = vector.shape_cast %69 : vector<256xf32> to vector<1x256xf32>
    %71 = arith.addf %70, %3 : vector<1x256xf32>
    %72 = arith.negf %71 : vector<1x256xf32>
    %73 = math.exp %72 : vector<1x256xf32>
    %cst_21 = arith.constant 1.000000e+00 : f32
    %74 = vector.broadcast %cst_21 : f32 to vector<1x256xf32>
    %75 = arith.addf %74, %73 : vector<1x256xf32>
    %76 = arith.divf %74, %75 : vector<1x256xf32>
    %cst_22 = arith.constant 0.74239999 : f32
    %77 = vector.broadcast %cst_22 : f32 to vector<1x256xf32>
    %78 = arith.subf %76, %77 : vector<1x256xf32>
    %cst_23 = arith.constant 0.0013483311 : f32
    %79 = vector.broadcast %cst_23 : f32 to vector<1x256xf32>
    %80 = arith.mulf %78, %79 : vector<1x256xf32>
    %c1_24 = arith.constant 1 : index
    %c0_25 = arith.constant 0 : index
    %c0_26 = arith.constant 0 : index
    %81 = vector.load %arg6[%c1_24, %c0_25, %c0_26] : memref<2x1x256xf32, #tpu.memory_space<vmem>>, vector<1x1x256xf32>
    %82 = vector.shape_cast %81 : vector<1x1x256xf32> to vector<1x256xf32>
    %83 = vector.shape_cast %80 : vector<1x256xf32> to vector<1x1x256xf32>
    tpu.vector_store %arg6[%c1_24, %c0_25, %c0_26], %83 {strides = array<i32>} : memref<2x1x256xf32, #tpu.memory_space<vmem>>, vector<1x1x256xf32>,
    return
  }
  func.func @transform_0(%arg0: i32) -> (i32, i32, i32) {
    %c0_i32 = arith.constant 0 : i32
    %c0_i32_0 = arith.constant 0 : i32
    %c0_i32_1 = arith.constant 0 : i32
    return %c0_i32, %c0_i32_0, %arg0 : i32, i32, i32
  }
  func.func @transform_1(%arg0: i32) -> (i32, i32) {
    %c0_i32 = arith.constant 0 : i32
    %c0_i32_0 = arith.constant 0 : i32
    %c0_i32_1 = arith.constant 0 : i32
    return %c0_i32, %c0_i32_0 : i32, i32
  }
  func.func @transform_2(%arg0: i32) -> (i32, i32) {
    %c0_i32 = arith.constant 0 : i32
    %c0_i32_0 = arith.constant 0 : i32
    %c0_i32_1 = arith.constant 0 : i32
    return %c0_i32, %c0_i32_0 : i32, i32
  }
  func.func @transform_3(%arg0: i32) -> (i32, i32) {
    %c0_i32 = arith.constant 0 : i32
    %c0_i32_0 = arith.constant 0 : i32
    %c0_i32_1 = arith.constant 0 : i32
    return %c0_i32, %c0_i32_0 : i32, i32
  }
  func.func @transform_4(%arg0: i32) -> (i32, i32) {
    %c0_i32 = arith.constant 0 : i32
    %c0_i32_0 = arith.constant 0 : i32
    return %c0_i32, %arg0 : i32, i32
  }
  func.func @transform_5(%arg0: i32) -> (i32, i32, i32) {
    %c0_i32 = arith.constant 0 : i32
    %c0_i32_0 = arith.constant 0 : i32
    %c0_i32_1 = arith.constant 0 : i32
    return %c0_i32, %c0_i32_0, %arg0 : i32, i32, i32
  }
}

</mosaic_0001>

<llo_original>
// kernel: tpu_custom_call.1
$region0: #{tpu_custom_call.1}
  #allocation0 [shape = 'u32[]', space=smem, size = 0x4, offset = 0x4, fixed_abs, tag = 'smem constant byte address 0x4 - core index']
  #allocation1 [shape = 'u32[72,128]{1,0:T(1,128)}', space=vmem, size = 0x9000, scoped, tag = 'internal scratch']
  %s0 = inlined_call_operand.vmem [shape: f32[2,3,256], index: 0, kind: input, shape index: {}]
  %s1 = inlined_call_operand.vmem [shape: f32[32,3], index: 1, kind: input, shape index: {}]
  %s2 = inlined_call_operand.vmem [shape: f32[32,1], index: 2, kind: input, shape index: {}]
  %s3 = inlined_call_operand.vmem [shape: f32[32,1], index: 3, kind: input, shape index: {}]
  %s4 = inlined_call_operand.vmem [shape: f32[1,256], index: 4, kind: input, shape index: {}]
  %s5 = inlined_call_operand.hbm [shape: f32[2,1,256], index: 5, kind: output, shape index: {}]
  %s6 = sld [smem:[#allocation0]]
  $region30: #{tpu_custom_call.1} parent=0
    _
  %s8 = ssub.s32 1, %s6
  %s9 = scalar_select 0, %s8, %s6
  $region1: #{tpu_custom_call.1} parent=0
    #allocation2 [shape = 'u8[2048]{0}', space=vmem, size = 0x800, scoped, tag = 'output window, operand 0, single buffered']
    #allocation3 [shape = 's32[1]{0}', space=sflag, size = 0x4, scoped, tag = 'scoped memory for tpu_custom_call.1']
    %10 = vsyncpa [#allocation3], 0
    // Predicated region
    $region2: #{tpu_custom_call.1} parent=1 // pred_check
      _
    $region3: #{tpu_custom_call.1} parent=1 // pred_check_branch
      %12 = sbr.rel (0) target = $region5
    $region4: #{tpu_custom_call.1} parent=1 // pred_region
      _
    $region5: #{tpu_custom_call.1} parent=1 // pred_fallthru
      _
    // Predicated region
    $region6: #{tpu_custom_call.1} parent=1 // pred_check
      _
    $region7: #{tpu_custom_call.1} parent=1 // pred_check_branch
      %14 = sbr.rel (0) target = $region9
    $region8: #{tpu_custom_call.1} parent=1 // pred_region
      _
    $region9: #{tpu_custom_call.1} parent=1 // pred_fallthru
      _
    // Predicated region
    $region10: #{tpu_custom_call.1} parent=1 // pred_check
      _
    $region11: #{tpu_custom_call.1} parent=1 // pred_check_branch
      %16 = sbr.rel (0) target = $region13
    $region12: #{tpu_custom_call.1} parent=1 // pred_region
      _
    $region13: #{tpu_custom_call.1} parent=1 // pred_fallthru
      _
    // Predicated region
    $region14: #{tpu_custom_call.1} parent=1 // pred_check
      _
    $region15: #{tpu_custom_call.1} parent=1 // pred_check_branch
      %18 = sbr.rel (0) target = $region17
    $region16: #{tpu_custom_call.1} parent=1 // pred_region
      _
    $region17: #{tpu_custom_call.1} parent=1 // pred_fallthru
      _
    // Predicated region
    $region18: #{tpu_custom_call.1} parent=1 // pred_check
      _
    $region19: #{tpu_custom_call.1} parent=1 // pred_check_branch
      %20 = sbr.rel (0) target = $region21
    $region20: #{tpu_custom_call.1} parent=1 // pred_region
      _
    $region21: #{tpu_custom_call.1} parent=1 // pred_fallthru
      _
    %v21 = vld [vmem:[%s1] sm:$0xff]
    %v22 = vld [vmem:[%s1 + $0x8] sm:$0xff]
    %v23 = vld [vmem:[%s1 + $0x10] sm:$0xff]
    %v24 = vld [vmem:[%s1 + $0x18] sm:$0xff]
    %v25 = vld [vmem:[%s2] sm:$0xff]
    %v26 = vld [vmem:[%s2 + $0x8] sm:$0xff]
    %v27 = vld [vmem:[%s2 + $0x10] sm:$0xff]
    %v28 = vld [vmem:[%s2 + $0x18] sm:$0xff]
    %v29 = vld [vmem:[%s3] sm:$0xff]
    %v30 = vld [vmem:[%s3 + $0x8] sm:$0xff]
    %v31 = vld [vmem:[%s3 + $0x10] sm:$0xff]
    %v32 = vld [vmem:[%s3 + $0x18] sm:$0xff]
    %v33 = vld [vmem:[%s4] sm:$0x3]
    %v34 = vld [vmem:[%s0] sm:$0x77]
    %36 = vset.pattern.permute.xlu0 0
    %37 = vperm.xlu0 %36, %v21
    %v38 = vpop.permute.xlu0 %37
    %41 = vset.pattern.permute.xlu0 0
    %42 = vperm.xlu0 %41, %v22
    %v43 = vpop.permute.xlu0 %42
    %46 = vset.pattern.permute.xlu0 0
    %47 = vperm.xlu0 %46, %v23
    %v48 = vpop.permute.xlu0 %47
    %51 = vset.pattern.permute.xlu0 0
    %52 = vperm.xlu0 %51, %v24
    %v53 = vpop.permute.xlu0 %52
    %v56 = vperm.slane %v34, 0
    %v57 = vperm.slane %v34, 4
    %v60 = vperm.slane %v56, 0
    %v61 = vperm.slane %v57, 0
    %v62 = vmul.f32 %v38, %v60
    %v63 = vmul.f32 %v38, %v61
    %v64 = vmul.f32 %v43, %v60
    %v65 = vmul.f32 %v43, %v61
    %v66 = vmul.f32 %v48, %v60
    %v67 = vmul.f32 %v48, %v61
    %v68 = vmul.f32 %v53, %v60
    %v69 = vmul.f32 %v53, %v61
    %71 = vset.pattern.permute.xlu0 0
    %72 = vperm.xlu0 %71, %v25
    %v73 = vpop.permute.xlu0 %72
    %76 = vset.pattern.permute.xlu0 0
    %77 = vperm.xlu0 %76, %v26
    %v78 = vpop.permute.xlu0 %77
    %81 = vset.pattern.permute.xlu0 0
    %82 = vperm.xlu0 %81, %v27
    %v83 = vpop.permute.xlu0 %82
    %86 = vset.pattern.permute.xlu0 0
    %87 = vperm.xlu0 %86, %v28
    %v88 = vpop.permute.xlu0 %87
    %v90 = vadd.f32 %v73, %v62
    %v91 = vadd.f32 %v73, %v63
    %v92 = vadd.f32 %v78, %v64
    %v93 = vadd.f32 %v78, %v65
    %v94 = vadd.f32 %v83, %v66
    %v95 = vadd.f32 %v83, %v67
    %v96 = vadd.f32 %v88, %v68
    %v97 = vadd.f32 %v88, %v69
    %98 = vset.pattern.permute.xlu0 1
    %99 = vperm.xlu0 %98, %v21
    %v100 = vpop.permute.xlu0 %99
    %102 = vset.pattern.permute.xlu0 1
    %103 = vperm.xlu0 %102, %v22
    %v104 = vpop.permute.xlu0 %103
    %106 = vset.pattern.permute.xlu0 1
    %107 = vperm.xlu0 %106, %v23
    %v108 = vpop.permute.xlu0 %107
    %110 = vset.pattern.permute.xlu0 1
    %111 = vperm.xlu0 %110, %v24
    %v112 = vpop.permute.xlu0 %111
    %v114 = vperm.slane %v34, 1
    %v115 = vperm.slane %v34, 5
    %v118 = vperm.slane %v114, 1
    %v119 = vperm.slane %v115, 1
    %v120 = vmul.f32 %v100, %v118
    %v121 = vmul.f32 %v100, %v119
    %v122 = vmul.f32 %v104, %v118
    %v123 = vmul.f32 %v104, %v119
    %v124 = vmul.f32 %v108, %v118
    %v125 = vmul.f32 %v108, %v119
    %v126 = vmul.f32 %v112, %v118
    %v127 = vmul.f32 %v112, %v119
    %v128 = vadd.f32 %v90, %v120
    %v129 = vadd.f32 %v91, %v121
    %v130 = vadd.f32 %v92, %v122
    %v131 = vadd.f32 %v93, %v123
    %v132 = vadd.f32 %v94, %v124
    %v133 = vadd.f32 %v95, %v125
    %v134 = vadd.f32 %v96, %v126
    %v135 = vadd.f32 %v97, %v127
    %136 = vset.pattern.permute.xlu0 2
    %137 = vperm.xlu0 %136, %v21
    %v138 = vpop.permute.xlu0 %137
    %140 = vset.pattern.permute.xlu0 2
    %141 = vperm.xlu0 %140, %v22
    %v142 = vpop.permute.xlu0 %141
    %144 = vset.pattern.permute.xlu0 2
    %145 = vperm.xlu0 %144, %v23
    %v146 = vpop.permute.xlu0 %145
    %148 = vset.pattern.permute.xlu0 2
    %149 = vperm.xlu0 %148, %v24
    %v150 = vpop.permute.xlu0 %149
    %v152 = vperm.slane %v34, 2
    %v153 = vperm.slane %v34, 6
    %v156 = vperm.slane %v152, 2
    %v157 = vperm.slane %v153, 2
    %v158 = vmul.f32 %v138, %v156
    %v159 = vmul.f32 %v138, %v157
    %v160 = vmul.f32 %v142, %v156
    %v161 = vmul.f32 %v142, %v157
    %v162 = vmul.f32 %v146, %v156
    %v163 = vmul.f32 %v146, %v157
    %v164 = vmul.f32 %v150, %v156
    %v165 = vmul.f32 %v150, %v157
    %v166 = vadd.f32 %v128, %v158
    %v167 = vadd.f32 %v129, %v159
    %v168 = vadd.f32 %v130, %v160
    %v169 = vadd.f32 %v131, %v161
    %v170 = vadd.f32 %v132, %v162
    %v171 = vadd.f32 %v133, %v163
    %v172 = vadd.f32 %v134, %v164
    %v173 = vadd.f32 %v135, %v165
    %v174 = vmax.f32 %v166, 0.0
    %v175 = vmax.f32 %v167, 0.0
    %v176 = vmax.f32 %v168, 0.0
    %v177 = vmax.f32 %v169, 0.0
    %v178 = vmax.f32 %v170, 0.0
    %v179 = vmax.f32 %v171, 0.0
    %v180 = vmax.f32 %v172, 0.0
    %v181 = vmax.f32 %v173, 0.0
    %183 = vset.pattern.permute.xlu0 0
    %184 = vperm.xlu0 %183, %v29
    %v185 = vpop.permute.xlu0 %184
    %188 = vset.pattern.permute.xlu0 0
    %189 = vperm.xlu0 %188, %v30
    %v190 = vpop.permute.xlu0 %189
    %193 = vset.pattern.permute.xlu0 0
    %194 = vperm.xlu0 %193, %v31
    %v195 = vpop.permute.xlu0 %194
    %198 = vset.pattern.permute.xlu0 0
    %199 = vperm.xlu0 %198, %v32
    %v200 = vpop.permute.xlu0 %199
    %v202 = vmul.f32 %v174, %v185
    %v203 = vmul.f32 %v175, %v185
    %v204 = vmul.f32 %v176, %v190
    %v205 = vmul.f32 %v177, %v190
    %v206 = vmul.f32 %v178, %v195
    %v207 = vmul.f32 %v179, %v195
    %v208 = vmul.f32 %v180, %v200
    %v209 = vmul.f32 %v181, %v200
    %v210 = vadd.f32 %v202, %v204
    %v211 = vadd.f32 %v210, %v206
    %v212 = vadd.f32 %v211, %v208
    %v213 = vrot.slane %v212, 4
    %v214 = vadd.f32 %v212, %v213
    %v215 = vrot.slane %v214, 2
    %v216 = vadd.f32 %v214, %v215
    %v217 = vrot.slane %v216, 1
    %v218 = vadd.f32 %v216, %v217
    %v219 = vadd.f32 %v203, %v205
    %v220 = vadd.f32 %v219, %v207
    %v221 = vadd.f32 %v220, %v209
    %v222 = vrot.slane %v221, 4
    %v223 = vadd.f32 %v221, %v222
    %v224 = vrot.slane %v223, 2
    %v225 = vadd.f32 %v223, %v224
    %v226 = vrot.slane %v225, 1
    %v227 = vadd.f32 %v225, %v226
    %v229 = vperm.slane %v33, 0
    %v230 = vperm.slane %v33, 1
    %v233 = vadd.f32 %v218, %v229
    %v234 = vadd.f32 %v227, %v230
    %v235 = vxor.u32 %v233, 2147483648
    %v236 = vxor.u32 %v234, 2147483648
    %v237 = vmul.f32 %v235, 1.442695
    %v238 = vpow.pop %v237
    %v239 = vmul.f32 %v236, 1.442695
    %v240 = vpow.pop %v239
    %v241 = vadd.f32 %v238, 1.0
    %v242 = vadd.f32 %v240, 1.0
    %v243 = vrcp.pop %v241
    %v244 = vmul.f32 %v241, %v243
    %v245 = vsub.f32 1.0, %v244
    %v246 = vmul.f32 %v243, %v245
    %v247 = vadd.f32 %v243, %v246
    %vm248 = vweird.f32 %v241
    %vm249 = vweird.f32 %v243
    %vm250 = vmor %vm248, %vm249
    %v251 = vsel %vm250, %v243, %v247
    %v252 = vand.u32 2147483647, %v241
    %vm253 = vcmp.eq.f32.partialorder %v252, 8.507059e+37
    %v254 = vand.u32 %v241, 2147483648
    %v255 = vor.u32 1.1754944e-38, %v254
    %v256 = vsel %vm253, %v255, %v251
    %v257 = vmul.f32 1.0, %v256
    %v258 = vrcp.pop %v242
    %v259 = vmul.f32 %v242, %v258
    %v260 = vsub.f32 1.0, %v259
    %v261 = vmul.f32 %v258, %v260
    %v262 = vadd.f32 %v258, %v261
    %vm263 = vweird.f32 %v242
    %vm264 = vweird.f32 %v258
    %vm265 = vmor %vm263, %vm264
    %v266 = vsel %vm265, %v258, %v262
    %v267 = vand.u32 2147483647, %v242
    %vm268 = vcmp.eq.f32.partialorder %v267, 8.507059e+37
    %v269 = vand.u32 %v242, 2147483648
    %v270 = vor.u32 1.1754944e-38, %v269
    %v271 = vsel %vm268, %v270, %v266
    %v272 = vmul.f32 1.0, %v271
    %v273 = vsub.f32 %v257, 0.7424
    %v274 = vsub.f32 %v272, 0.7424
    %v275 = vmul.f32 %v273, 0.0013483311
    %v276 = vmul.f32 %v274, 0.0013483311
    %v279 = vrot.slane %v276, 7
    %vm280 = vcmask 1040384
    %v281 = vsel %vm280, %v275, %v279
    %v283 = vlaneseq
    %vm284 = vcmp.ge.s32.totalorder %v283, 0
    %vm285 = vcmp.lt.s32.totalorder %v283, 256
    %vm286 = vmand %vm284, %vm285
    %287 = vst.msk [vmem:[#allocation2] sm:$0x3] %vm286, %v281
    %s288 = scalar_lea.vmem %s0, 8
    %v289 = vld [vmem:[%s288] sm:$0x77]
    %v291 = vperm.slane %v289, 0
    %v292 = vperm.slane %v289, 4
    %v295 = vperm.slane %v291, 0
    %v296 = vperm.slane %v292, 0
    %v297 = vmul.f32 %v38, %v295
    %v298 = vmul.f32 %v38, %v296
    %v299 = vmul.f32 %v43, %v295
    %v300 = vmul.f32 %v43, %v296
    %v301 = vmul.f32 %v48, %v295
    %v302 = vmul.f32 %v48, %v296
    %v303 = vmul.f32 %v53, %v295
    %v304 = vmul.f32 %v53, %v296
    %v305 = vadd.f32 %v73, %v297
    %v306 = vadd.f32 %v73, %v298
    %v307 = vadd.f32 %v78, %v299
    %v308 = vadd.f32 %v78, %v300
    %v309 = vadd.f32 %v83, %v301
    %v310 = vadd.f32 %v83, %v302
    %v311 = vadd.f32 %v88, %v303
    %v312 = vadd.f32 %v88, %v304
    %v313 = vperm.slane %v289, 1
    %v314 = vperm.slane %v289, 5
    %v317 = vperm.slane %v313, 1
    %v318 = vperm.slane %v314, 1
    %v319 = vmul.f32 %v100, %v317
    %v320 = vmul.f32 %v100, %v318
    %v321 = vmul.f32 %v104, %v317
    %v322 = vmul.f32 %v104, %v318
    %v323 = vmul.f32 %v108, %v317
    %v324 = vmul.f32 %v108, %v318
    %v325 = vmul.f32 %v112, %v317
    %v326 = vmul.f32 %v112, %v318
    %v327 = vadd.f32 %v305, %v319
    %v328 = vadd.f32 %v306, %v320
    %v329 = vadd.f32 %v307, %v321
    %v330 = vadd.f32 %v308, %v322
    %v331 = vadd.f32 %v309, %v323
    %v332 = vadd.f32 %v310, %v324
    %v333 = vadd.f32 %v311, %v325
    %v334 = vadd.f32 %v312, %v326
    %v335 = vperm.slane %v289, 2
    %v336 = vperm.slane %v289, 6
    %v339 = vperm.slane %v335, 2
    %v340 = vperm.slane %v336, 2
    %v341 = vmul.f32 %v138, %v339
    %v342 = vmul.f32 %v138, %v340
    %v343 = vmul.f32 %v142, %v339
    %v344 = vmul.f32 %v142, %v340
    %v345 = vmul.f32 %v146, %v339
    %v346 = vmul.f32 %v146, %v340
    %v347 = vmul.f32 %v150, %v339
    %v348 = vmul.f32 %v150, %v340
    %v349 = vadd.f32 %v327, %v341
    %v350 = vadd.f32 %v328, %v342
    %v351 = vadd.f32 %v329, %v343
    %v352 = vadd.f32 %v330, %v344
    %v353 = vadd.f32 %v331, %v345
    %v354 = vadd.f32 %v332, %v346
    %v355 = vadd.f32 %v333, %v347
    %v356 = vadd.f32 %v334, %v348
    %v357 = vmax.f32 %v349, 0.0
    %v358 = vmax.f32 %v350, 0.0
    %v359 = vmax.f32 %v351, 0.0
    %v360 = vmax.f32 %v352, 0.0
    %v361 = vmax.f32 %v353, 0.0
    %v362 = vmax.f32 %v354, 0.0
    %v363 = vmax.f32 %v355, 0.0
    %v364 = vmax.f32 %v356, 0.0
    %v365 = vmul.f32 %v357, %v185
    %v366 = vmul.f32 %v358, %v185
    %v367 = vmul.f32 %v359, %v190
    %v368 = vmul.f32 %v360, %v190
    %v369 = vmul.f32 %v361, %v195
    %v370 = vmul.f32 %v362, %v195
    %v371 = vmul.f32 %v363, %v200
    %v372 = vmul.f32 %v364, %v200
    %v373 = vadd.f32 %v365, %v367
    %v374 = vadd.f32 %v373, %v369
    %v375 = vadd.f32 %v374, %v371
    %v376 = vrot.slane %v375, 4
    %v377 = vadd.f32 %v375, %v376
    %v378 = vrot.slane %v377, 2
    %v379 = vadd.f32 %v377, %v378
    %v380 = vrot.slane %v379, 1
    %v381 = vadd.f32 %v379, %v380
    %v382 = vadd.f32 %v366, %v368
    %v383 = vadd.f32 %v382, %v370
    %v384 = vadd.f32 %v383, %v372
    %v385 = vrot.slane %v384, 4
    %v386 = vadd.f32 %v384, %v385
    %v387 = vrot.slane %v386, 2
    %v388 = vadd.f32 %v386, %v387
    %v389 = vrot.slane %v388, 1
    %v390 = vadd.f32 %v388, %v389
    %v391 = vadd.f32 %v381, %v229
    %v392 = vadd.f32 %v390, %v230
    %v393 = vxor.u32 %v391, 2147483648
    %v394 = vxor.u32 %v392, 2147483648
    %v395 = vmul.f32 %v393, 1.442695
    %v396 = vpow.pop %v395
    %v397 = vmul.f32 %v394, 1.442695
    %v398 = vpow.pop %v397
    %v399 = vadd.f32 %v396, 1.0
    %v400 = vadd.f32 %v398, 1.0
    %v401 = vrcp.pop %v399
    %v402 = vmul.f32 %v399, %v401
    %v403 = vsub.f32 1.0, %v402
    %v404 = vmul.f32 %v401, %v403
    %v405 = vadd.f32 %v401, %v404
    %vm406 = vweird.f32 %v399
    %vm407 = vweird.f32 %v401
    %vm408 = vmor %vm406, %vm407
    %v409 = vsel %vm408, %v401, %v405
    %v410 = vand.u32 2147483647, %v399
    %vm411 = vcmp.eq.f32.partialorder %v410, 8.507059e+37
    %v412 = vand.u32 %v399, 2147483648
    %v413 = vor.u32 1.1754944e-38, %v412
    %v414 = vsel %vm411, %v413, %v409
    %v415 = vmul.f32 1.0, %v414
    %v416 = vrcp.pop %v400
    %v417 = vmul.f32 %v400, %v416
    %v418 = vsub.f32 1.0, %v417
    %v419 = vmul.f32 %v416, %v418
    %v420 = vadd.f32 %v416, %v419
    %vm421 = vweird.f32 %v400
    %vm422 = vweird.f32 %v416
    %vm423 = vmor %vm421, %vm422
    %v424 = vsel %vm423, %v416, %v420
    %v425 = vand.u32 2147483647, %v400
    %vm426 = vcmp.eq.f32.partialorder %v425, 8.507059e+37
    %v427 = vand.u32 %v400, 2147483648
    %v428 = vor.u32 1.1754944e-38, %v427
    %v429 = vsel %vm426, %v428, %v424
    %v430 = vmul.f32 1.0, %v429
    %v431 = vsub.f32 %v415, 0.7424
    %v432 = vsub.f32 %v430, 0.7424
    %v433 = vmul.f32 %v431, 0.0013483311
    %v434 = vmul.f32 %v432, 0.0013483311
    %v437 = vrot.slane %v434, 7
    %v438 = vsel %vm280, %v433, %v437
    %s440 = scalar_lea.vmem [#allocation2], 2
    %441 = vst.msk [vmem:[%s440] sm:$0x3] %vm286, %v438
    // Predicated region
    $region22: #{tpu_custom_call.1} parent=1 // pred_check
      _
    $region23: #{tpu_custom_call.1} parent=1 // pred_check_branch
      %443 = sbr.rel (0) target = $region25
    $region24: #{tpu_custom_call.1} parent=1 // pred_region
      %445 = vsyncadd [#allocation3], 0
      %s446 = sshll.u32 [#allocation2], 4
      %s447 = int_to_ptr.vmem [resolvable:$true] %s446
      %s448 = sshll.u32 %s5, 4
      %s449 = int_to_ptr.hbm [resolvable:$true] %s448
      %454 = dma.vmem_to_hbm [thread:$0]  %s447, 64, %s449, [#allocation3], 32, 32, 2
    $region25: #{tpu_custom_call.1} parent=1 // pred_fallthru
      _
    // Predicated region
    $region26: #{tpu_custom_call.1} parent=1 // pred_check
      _
    $region27: #{tpu_custom_call.1} parent=1 // pred_check_branch
      %456 = sbr.rel (0) target = $region29
    $region28: #{tpu_custom_call.1} parent=1 // pred_region
      %458 = dma.done [#allocation3], 64
    $region29: #{tpu_custom_call.1} parent=1 // pred_fallthru
      _
    %459 = vsyncpa [#allocation3], 1

</llo_original>
